<compile_context>
chip_gen: v7x
topology: tpu7x:2x2x1
jax: 0.10.0
libtpu: 0.0.40
codegen_flags: <defaults>
</compile_context>

<pallas_src>
import functools

import jax
import jax.numpy as jnp
from jax.experimental import pallas as pl
from jax.experimental.pallas import tpu as pltpu


def _banded_weight(w_hwio, W):
    """Fold (kw, Cin) into the contraction dim as a block-banded matrix.

    w_hwio: (3, 3, Cin, Cout) -> (3, W*Cin, W*Cout) with
      band[kh, wi*Cin + ci, wo*Cout + co] = w_hwio[kh, wi - wo + 1, ci, co]
    (zero when the tap is out of range).  Boundary taps that would read the
    left/right zero padding contribute nothing, so no pad columns are needed:
    y[h, wo*Cout+co] = sum_kh xpad_row[h+kh] @ band[kh].
    """
    KH, KW, Cin, Cout = w_hwio.shape
    wi = jnp.arange(W)[:, None]                     # input column block
    wo = jnp.arange(W)[None, :]                     # output column
    kw = wi - wo + 1                                # tap index (padding=1)
    mask = ((kw >= 0) & (kw < KW)).astype(w_hwio.dtype)
    kw_safe = jnp.clip(kw, 0, KW - 1)
    blocks = w_hwio[:, kw_safe] * mask[None, :, :, None, None]  # (KH,W,W,Cin,Cout)
    return blocks.transpose(0, 1, 3, 2, 4).reshape(KH, W * Cin, W * Cout)


def _block_kernel(x_ref, w1_ref, b1_ref, w2_ref, b2_ref, o_ref,
                  xpad_ref, hpad_ref, *, Bt, H, W, Cin, Cout):
    """Fused conv3x3 -> ReLU -> conv3x3 for Bt stacked images.

    x_ref:   (Bt, H, W*Cin)        NHWC rows flattened (lane axis = W*Cin)
    w1_ref:  (3, W*Cin,  W*Cout)   banded conv1 weights (per kh)
    b1_ref:  (1, W*Cout)           conv1 bias tiled across W (f32)
    w2_ref:  (3, W*Cout, W*Cout)   banded conv2 weights
    b2_ref:  (1, W*Cout)
    o_ref:   (Bt, H, W*Cout)       lane-dense output rows
    xpad_ref:(Bt*(H+1)+1, W*Cin)   VMEM row-stack: zero row, img0, zero row,
    hpad_ref:(Bt*(H+1)+1, W*Cout)  img1, zero row, ... (shared pad rows)
    """
    S = H + 1                     # rows per image in the padded stack
    R = Bt * S - 1                # matmul M (valid rows + Bt-1 straddle rows)
    WCin, WCout = W * Cin, W * Cout

    # --- zero only the shared boundary rows (interior rows are fully
    #     overwritten below; a few single-row stores per step, no full fill) --
    zx = jnp.zeros((1, WCin), xpad_ref.dtype)
    for b in range(Bt + 1):
        xpad_ref[b * S:b * S + 1, :] = zx
    zh = jnp.zeros((1, WCout), hpad_ref.dtype)
    hpad_ref[0:1, :] = zh
    hpad_ref[Bt * S:Bt * S + 1, :] = zh

    # --- stage the Bt input images into the padded row-stack (lane offset 0) -
    for b in range(Bt):
        xpad_ref[b * S + 1:b * S + 1 + H, :] = x_ref[b]

    # --- conv1 + bias + ReLU: 3 lane-dense matmuls, f32 accumulation --------
    acc = jnp.dot(xpad_ref[0:R, :], w1_ref[0],
                  preferred_element_type=jnp.float32)
    acc += jnp.dot(xpad_ref[1:1 + R, :], w1_ref[1],
                   preferred_element_type=jnp.float32)
    acc += jnp.dot(xpad_ref[2:2 + R, :], w1_ref[2],
                   preferred_element_type=jnp.float32)
    h = jnp.maximum(acc + b1_ref[...], 0.0)

    # zero the Bt-1 rows that straddle two images, then re-pad in VMEM
    # (they land exactly on the shared zero-pad rows of hpad).
    row = jax.lax.broadcasted_iota(jnp.int32, (R, 1), 0)
    h = jnp.where((row % S) < H, h, 0.0)
    hpad_ref[1:1 + R, :] = h.astype(hpad_ref.dtype)

    # --- conv2 + bias --------------------------------------------------------
    acc2 = jnp.dot(hpad_ref[0:R, :], w2_ref[0],
                   preferred_element_type=jnp.float32)
    acc2 += jnp.dot(hpad_ref[1:1 + R, :], w2_ref[1],
                    preferred_element_type=jnp.float32)
    acc2 += jnp.dot(hpad_ref[2:2 + R, :], w2_ref[2],
                    preferred_element_type=jnp.float32)
    acc2 = acc2 + b2_ref[...]

    # --- lane-dense output: pick the H valid rows of each image --------------
    for b in range(Bt):
        o_ref[b] = acc2[b * S:b * S + H, :].astype(o_ref.dtype)


def make_block_params(w1_oihw, b1, w2_oihw, b2, W,
                      compute_dtype=jnp.bfloat16):
    """Banded weights + tiled bias rows (precompute once per weight update)."""
    w1_band = _banded_weight(jnp.transpose(w1_oihw, (2, 3, 1, 0)), W)
    w2_band = _banded_weight(jnp.transpose(w2_oihw, (2, 3, 1, 0)), W)
    Cout = w1_oihw.shape[0]
    return dict(
        w1=w1_band.astype(compute_dtype),
        w2=w2_band.astype(compute_dtype),
        b1=jnp.tile(b1, W).reshape(1, W * Cout).astype(jnp.float32),
        b2=jnp.tile(b2, W).reshape(1, W * Cout).astype(jnp.float32),
    )


def _pick_bt(B, H, target_rows=256):
    """Largest divisor of B with Bt*H <= target MXU rows (256 on v6e/v7x)."""
    bt = max(1, min(B, max(1, target_rows // max(H, 1))))
    while B % bt:
        bt -= 1
    return bt


def block_forward(x_nchw, w1_oihw, b1, w2_oihw, b2, *,
                  compute_dtype=jnp.bfloat16):
    """Equivalent of Block.forward: conv2(relu(conv1(x))). NCHW in/out."""
    B, Cin, H, W = x_nchw.shape
    Cout = w1_oihw.shape[0]

    # In a real model: hoist out of the forward pass (per weight update).
    params = make_block_params(w1_oihw, b1, w2_oihw, b2, W, compute_dtype)

    # Layout glue required by the NCHW module spec (see TODO at top).
    x_flat = (jnp.transpose(x_nchw, (0, 2, 3, 1))
              .reshape(B, H, W * Cin).astype(compute_dtype))

    Bt = _pick_bt(B, H)
    S = H + 1
    kernel = functools.partial(_block_kernel, Bt=Bt, H=H, W=W,
                               Cin=Cin, Cout=Cout)

    y_flat = pl.pallas_call(
        kernel,
        out_shape=jax.ShapeDtypeStruct((B, H, W * Cout), x_nchw.dtype),
        grid_spec=pltpu.PrefetchScalarGridSpec(
            num_scalar_prefetch=0,
            grid=(B // Bt,),
            in_specs=[
                pl.BlockSpec((Bt, H, W * Cin), lambda i: (i, 0, 0)),
                pl.BlockSpec((3, W * Cin, W * Cout), lambda i: (0, 0, 0)),
                pl.BlockSpec((1, W * Cout), lambda i: (0, 0)),
                pl.BlockSpec((3, W * Cout, W * Cout), lambda i: (0, 0, 0)),
                pl.BlockSpec((1, W * Cout), lambda i: (0, 0)),
            ],
            out_specs=pl.BlockSpec((Bt, H, W * Cout), lambda i: (i, 0, 0)),
            scratch_shapes=[
                pltpu.VMEM((Bt * S + 1, W * Cin), compute_dtype),
                pltpu.VMEM((Bt * S + 1, W * Cout), compute_dtype),
            ],
        ),
        compiler_params=pltpu.CompilerParams(
            dimension_semantics=("parallel",)),
    )(x_flat, params["w1"], params["b1"], params["w2"], params["b2"])

    y = y_flat.reshape(B, H, W, Cout)
    return jnp.transpose(y, (0, 3, 1, 2))            # NHWC -> NCHW


def _reference(x_nchw, w1_oihw, b1, w2_oihw, b2):
    """Plain-JAX reference matching PyTorch Conv2d semantics (f32)."""
    dn = ("NCHW", "OIHW", "NCHW")
    h = jax.lax.conv_general_dilated(
        x_nchw, w1_oihw, (1, 1), ((1, 1), (1, 1)), dimension_numbers=dn)
    h = jnp.maximum(h + b1[None, :, None, None], 0.0)
    y = jax.lax.conv_general_dilated(
        h, w2_oihw, (1, 1), ((1, 1), (1, 1)), dimension_numbers=dn)
    return y + b2[None, :, None, None]


if __name__ == "__main__":
    # Small deterministic setup consistent with Block(in_ch, out_ch).
    in_ch, out_ch = 4, 8
    B, H, W = 2, 16, 16

    key = jax.random.PRNGKey(0)
    kx, kw1, kb1, kw2, kb2 = jax.random.split(key, 5)

    x = jax.random.normal(kx, (B, in_ch, H, W), dtype=jnp.float32)   # NCHW
    w1 = 0.1 * jax.random.normal(kw1, (out_ch, in_ch, 3, 3), jnp.float32)
    b1 = 0.1 * jax.random.normal(kb1, (out_ch,), jnp.float32)
    w2 = 0.1 * jax.random.normal(kw2, (out_ch, out_ch, 3, 3), jnp.float32)
    b2 = 0.1 * jax.random.normal(kb2, (out_ch,), jnp.float32)

    ref = _reference(x, w1, b1, w2, b2)

    # Strict structural check with f32 operands (exact same kernel code path).
    out_f32 = jax.block_until_ready(
        block_forward(x, w1, b1, w2, b2, compute_dtype=jnp.float32))
    assert out_f32.shape == (B, out_ch, H, W), out_f32.shape
    assert jnp.allclose(out_f32, ref, atol=1e-4, rtol=1e-4), (
        float(jnp.max(jnp.abs(out_f32 - ref))))

    # Performance path: bf16 matmul operands, f32 accumulation (per review,
    # requires ~1e-2 level tolerance against the f32 reference).
    out = jax.block_until_ready(block_forward(x, w1, b1, w2, b2))
    assert out.shape == (B, out_ch, H, W), out.shape
    assert jnp.allclose(out, ref, atol=3e-2, rtol=3e-2), (
        float(jnp.max(jnp.abs(out - ref))))

    print("KERNEL_OK")
</pallas_src>

<mosaic_0001>
module attributes {stable_mosaic.version = 11 : i64} {
  func.func @_block_kernel(%arg0: i32, %arg1: memref<2x16x64xf32, #tpu.memory_space<vmem>>, %arg2: memref<3x64x128xf32, #tpu.memory_space<vmem>>, %arg3: memref<1x128xf32, #tpu.memory_space<vmem>>, %arg4: memref<3x128x128xf32, #tpu.memory_space<vmem>>, %arg5: memref<1x128xf32, #tpu.memory_space<vmem>>, %arg6: memref<2x16x128xf32, #tpu.memory_space<vmem>>, %arg7: memref<35x64xf32, #tpu.memory_space<vmem>>, %arg8: memref<35x128xf32, #tpu.memory_space<vmem>>) attributes {dimension_semantics = [#tpu.dimension_semantics<parallel>], iteration_bounds = array<i64: 1>, scalar_prefetch = 0 : i64, scratch_operands = 2 : i64, tpu.core_type = #tpu.core_type<tc>, window_params = [{transform_indices = @transform_0, window_bounds = array<i64: 2, 16, 64>}, {pipeline_mode = #tpu.pipeline_mode<synchronous>, transform_indices = @transform_1, window_bounds = array<i64: 3, 64, 128>}, {pipeline_mode = #tpu.pipeline_mode<synchronous>, transform_indices = @transform_2, window_bounds = array<i64: 1, 128>}, {pipeline_mode = #tpu.pipeline_mode<synchronous>, transform_indices = @transform_3, window_bounds = array<i64: 3, 128, 128>}, {pipeline_mode = #tpu.pipeline_mode<synchronous>, transform_indices = @transform_4, window_bounds = array<i64: 1, 128>}, {transform_indices = @transform_5, window_bounds = array<i64: 2, 16, 128>}]} {
    %cst = arith.constant 0.000000e+00 : f32
    %0 = vector.broadcast %cst : f32 to vector<1x64xf32>
    %c0 = arith.constant 0 : index
    %c0_0 = arith.constant 0 : index
    %1 = vector.load %arg7[%c0, %c0_0] : memref<35x64xf32, #tpu.memory_space<vmem>>, vector<1x64xf32>
    tpu.vector_store %arg7[%c0, %c0_0], %0 {strides = array<i32>} : memref<35x64xf32, #tpu.memory_space<vmem>>, vector<1x64xf32>,
    %c17 = arith.constant 17 : index
    %c0_1 = arith.constant 0 : index
    %2 = vector.load %arg7[%c17, %c0_1] : memref<35x64xf32, #tpu.memory_space<vmem>>, vector<1x64xf32>
    tpu.vector_store %arg7[%c17, %c0_1], %0 {strides = array<i32>} : memref<35x64xf32, #tpu.memory_space<vmem>>, vector<1x64xf32>,
    %c34 = arith.constant 34 : index
    %c0_2 = arith.constant 0 : index
    %3 = vector.load %arg7[%c34, %c0_2] : memref<35x64xf32, #tpu.memory_space<vmem>>, vector<1x64xf32>
    tpu.vector_store %arg7[%c34, %c0_2], %0 {strides = array<i32>} : memref<35x64xf32, #tpu.memory_space<vmem>>, vector<1x64xf32>,
    %cst_3 = arith.constant 0.000000e+00 : f32
    %4 = vector.broadcast %cst_3 : f32 to vector<1x128xf32>
    %c0_4 = arith.constant 0 : index
    %c0_5 = arith.constant 0 : index
    %5 = vector.load %arg8[%c0_4, %c0_5] : memref<35x128xf32, #tpu.memory_space<vmem>>, vector<1x128xf32>
    tpu.vector_store %arg8[%c0_4, %c0_5], %4 {strides = array<i32>} : memref<35x128xf32, #tpu.memory_space<vmem>>, vector<1x128xf32>,
    %c34_6 = arith.constant 34 : index
    %c0_7 = arith.constant 0 : index
    %6 = vector.load %arg8[%c34_6, %c0_7] : memref<35x128xf32, #tpu.memory_space<vmem>>, vector<1x128xf32>
    tpu.vector_store %arg8[%c34_6, %c0_7], %4 {strides = array<i32>} : memref<35x128xf32, #tpu.memory_space<vmem>>, vector<1x128xf32>,
    %c0_8 = arith.constant 0 : index
    %c0_9 = arith.constant 0 : index
    %c0_10 = arith.constant 0 : index
    %7 = vector.load %arg1[%c0_8, %c0_9, %c0_10] : memref<2x16x64xf32, #tpu.memory_space<vmem>>, vector<1x16x64xf32>
    %8 = vector.shape_cast %7 : vector<1x16x64xf32> to vector<16x64xf32>
    %c1 = arith.constant 1 : index
    %c0_11 = arith.constant 0 : index
    %9 = vector.load %arg7[%c1, %c0_11] : memref<35x64xf32, #tpu.memory_space<vmem>>, vector<16x64xf32>
    tpu.vector_store %arg7[%c1, %c0_11], %8 {strides = array<i32>} : memref<35x64xf32, #tpu.memory_space<vmem>>, vector<16x64xf32>,
    %c1_12 = arith.constant 1 : index
    %c0_13 = arith.constant 0 : index
    %c0_14 = arith.constant 0 : index
    %10 = vector.load %arg1[%c1_12, %c0_13, %c0_14] : memref<2x16x64xf32, #tpu.memory_space<vmem>>, vector<1x16x64xf32>
    %11 = vector.shape_cast %10 : vector<1x16x64xf32> to vector<16x64xf32>
    %c18 = arith.constant 18 : index
    %c0_15 = arith.constant 0 : index
    %12 = vector.load %arg7[%c18, %c0_15] : memref<35x64xf32, #tpu.memory_space<vmem>>, vector<16x64xf32>
    tpu.vector_store %arg7[%c18, %c0_15], %11 {strides = array<i32>} : memref<35x64xf32, #tpu.memory_space<vmem>>, vector<16x64xf32>,
    %c0_16 = arith.constant 0 : index
    %c0_17 = arith.constant 0 : index
    %13 = vector.load %arg7[%c0_16, %c0_17] : memref<35x64xf32, #tpu.memory_space<vmem>>, vector<33x64xf32>
    %c0_18 = arith.constant 0 : index
    %c0_19 = arith.constant 0 : index
    %c0_20 = arith.constant 0 : index
    %14 = vector.load %arg2[%c0_18, %c0_19, %c0_20] : memref<3x64x128xf32, #tpu.memory_space<vmem>>, vector<1x64x128xf32>
    %15 = vector.shape_cast %14 : vector<1x64x128xf32> to vector<64x128xf32>
    %cst_21 = arith.constant dense<0.000000e+00> : vector<33x128xf32>
    %16 = tpu.matmul %13, %15, %cst_21 {dimension_numbers = #tpu.dot_dimension_numbers<[1], [0], [0], [1], [0, 0, 1, 1], [], []>} : vector<33x64xf32>, vector<64x128xf32>, vector<33x128xf32> -> vector<33x128xf32>
    %c1_22 = arith.constant 1 : index
    %c0_23 = arith.constant 0 : index
    %17 = vector.load %arg7[%c1_22, %c0_23] : memref<35x64xf32, #tpu.memory_space<vmem>>, vector<33x64xf32>
    %c1_24 = arith.constant 1 : index
    %c0_25 = arith.constant 0 : index
    %c0_26 = arith.constant 0 : index
    %18 = vector.load %arg2[%c1_24, %c0_25, %c0_26] : memref<3x64x128xf32, #tpu.memory_space<vmem>>, vector<1x64x128xf32>
    %19 = vector.shape_cast %18 : vector<1x64x128xf32> to vector<64x128xf32>
    %cst_27 = arith.constant dense<0.000000e+00> : vector<33x128xf32>
    %20 = tpu.matmul %17, %19, %cst_27 {dimension_numbers = #tpu.dot_dimension_numbers<[1], [0], [0], [1], [0, 0, 1, 1], [], []>} : vector<33x64xf32>, vector<64x128xf32>, vector<33x128xf32> -> vector<33x128xf32>
    %21 = arith.addf %16, %20 : vector<33x128xf32>
    %c2 = arith.constant 2 : index
    %c0_28 = arith.constant 0 : index
    %22 = vector.load %arg7[%c2, %c0_28] : memref<35x64xf32, #tpu.memory_space<vmem>>, vector<33x64xf32>
    %c2_29 = arith.constant 2 : index
    %c0_30 = arith.constant 0 : index
    %c0_31 = arith.constant 0 : index
    %23 = vector.load %arg2[%c2_29, %c0_30, %c0_31] : memref<3x64x128xf32, #tpu.memory_space<vmem>>, vector<1x64x128xf32>
    %24 = vector.shape_cast %23 : vector<1x64x128xf32> to vector<64x128xf32>
    %cst_32 = arith.constant dense<0.000000e+00> : vector<33x128xf32>
    %25 = tpu.matmul %22, %24, %cst_32 {dimension_numbers = #tpu.dot_dimension_numbers<[1], [0], [0], [1], [0, 0, 1, 1], [], []>} : vector<33x64xf32>, vector<64x128xf32>, vector<33x128xf32> -> vector<33x128xf32>
    %26 = arith.addf %21, %25 : vector<33x128xf32>
    %c0_33 = arith.constant 0 : index
    %c0_34 = arith.constant 0 : index
    %27 = vector.load %arg3[%c0_33, %c0_34] : memref<1x128xf32, #tpu.memory_space<vmem>>, vector<1x128xf32>
    %28 = vector.broadcast %27 : vector<1x128xf32> to vector<33x128xf32>
    %29 = arith.addf %26, %28 : vector<33x128xf32>
    %cst_35 = arith.constant 0.000000e+00 : f32
    %30 = vector.broadcast %cst_35 : f32 to vector<33x128xf32>
    %31 = arith.maximumf %29, %30 : vector<33x128xf32>
    %32 = tpu.iota {dimensions = array<i32: 0>} : vector<33x1xi32>
    %c17_i32 = arith.constant 17 : i32
    %c0_i32 = arith.constant 0 : i32
    %33 = arith.cmpi eq, %c17_i32, %c0_i32 : i32
    %c1_i32 = arith.constant 1 : i32
    %34 = arith.select %33, %c1_i32, %c17_i32 : i32
    %35 = vector.broadcast %34 : i32 to vector<33x1xi32>
    %36 = arith.remsi %32, %35 : vector<33x1xi32>
    %c0_i32_36 = arith.constant 0 : i32
    %37 = vector.broadcast %c0_i32_36 : i32 to vector<33x1xi32>
    %38 = arith.cmpi ne, %36, %37 : vector<33x1xi32>
    %c0_i32_37 = arith.constant 0 : i32
    %39 = vector.broadcast %c0_i32_37 : i32 to vector<33x1xi32>
    %40 = arith.cmpi slt, %36, %39 : vector<33x1xi32>
    %c0_i32_38 = arith.constant 0 : i32
    %41 = arith.cmpi slt, %34, %c0_i32_38 : i32
    %42 = vector.broadcast %41 : i1 to vector<33x1xi1>
    %43 = vector.broadcast %42 : vector<33x1xi1> to vector<33x1xi1>
    %44 = arith.xori %40, %43 : vector<33x1xi1>
    %45 = arith.andi %44, %38 : vector<33x1xi1>
    %46 = vector.broadcast %34 : i32 to vector<33x1xi32>
    %47 = arith.addi %36, %46 : vector<33x1xi32>
    %48 = arith.select %45, %47, %36 : vector<33x1xi1>, vector<33x1xi32>
    %c16_i32 = arith.constant 16 : i32
    %49 = vector.broadcast %c16_i32 : i32 to vector<33x1xi32>
    %50 = arith.cmpi slt, %48, %49 : vector<33x1xi32>
    %cst_39 = arith.constant 0.000000e+00 : f32
    %51 = vector.shape_cast %50 : vector<33x1xi1> to vector<33x1xi1>
    %52 = vector.broadcast %51 : vector<33x1xi1> to vector<33x128xi1>
    %53 = vector.broadcast %cst_39 : f32 to vector<33x128xf32>
    %54 = arith.select %52, %31, %53 : vector<33x128xi1>, vector<33x128xf32>
    %c1_40 = arith.constant 1 : index
    %c0_41 = arith.constant 0 : index
    %55 = vector.load %arg8[%c1_40, %c0_41] : memref<35x128xf32, #tpu.memory_space<vmem>>, vector<33x128xf32>
    tpu.vector_store %arg8[%c1_40, %c0_41], %54 {strides = array<i32>} : memref<35x128xf32, #tpu.memory_space<vmem>>, vector<33x128xf32>,
    %c0_42 = arith.constant 0 : index
    %c0_43 = arith.constant 0 : index
    %56 = vector.load %arg8[%c0_42, %c0_43] : memref<35x128xf32, #tpu.memory_space<vmem>>, vector<33x128xf32>
    %c0_44 = arith.constant 0 : index
    %c0_45 = arith.constant 0 : index
    %c0_46 = arith.constant 0 : index
    %57 = vector.load %arg4[%c0_44, %c0_45, %c0_46] : memref<3x128x128xf32, #tpu.memory_space<vmem>>, vector<1x128x128xf32>
    %58 = vector.shape_cast %57 : vector<1x128x128xf32> to vector<128x128xf32>
    %cst_47 = arith.constant dense<0.000000e+00> : vector<33x128xf32>
    %59 = tpu.matmul %56, %58, %cst_47 {dimension_numbers = #tpu.dot_dimension_numbers<[1], [0], [0], [1], [0, 0, 1, 1], [], []>} : vector<33x128xf32>, vector<128x128xf32>, vector<33x128xf32> -> vector<33x128xf32>
    %c1_48 = arith.constant 1 : index
    %c0_49 = arith.constant 0 : index
    %60 = vector.load %arg8[%c1_48, %c0_49] : memref<35x128xf32, #tpu.memory_space<vmem>>, vector<33x128xf32>
    %c1_50 = arith.constant 1 : index
    %c0_51 = arith.constant 0 : index
    %c0_52 = arith.constant 0 : index
    %61 = vector.load %arg4[%c1_50, %c0_51, %c0_52] : memref<3x128x128xf32, #tpu.memory_space<vmem>>, vector<1x128x128xf32>
    %62 = vector.shape_cast %61 : vector<1x128x128xf32> to vector<128x128xf32>
    %cst_53 = arith.constant dense<0.000000e+00> : vector<33x128xf32>
    %63 = tpu.matmul %60, %62, %cst_53 {dimension_numbers = #tpu.dot_dimension_numbers<[1], [0], [0], [1], [0, 0, 1, 1], [], []>} : vector<33x128xf32>, vector<128x128xf32>, vector<33x128xf32> -> vector<33x128xf32>
    %64 = arith.addf %59, %63 : vector<33x128xf32>
    %c2_54 = arith.constant 2 : index
    %c0_55 = arith.constant 0 : index
    %65 = vector.load %arg8[%c2_54, %c0_55] : memref<35x128xf32, #tpu.memory_space<vmem>>, vector<33x128xf32>
    %c2_56 = arith.constant 2 : index
    %c0_57 = arith.constant 0 : index
    %c0_58 = arith.constant 0 : index
    %66 = vector.load %arg4[%c2_56, %c0_57, %c0_58] : memref<3x128x128xf32, #tpu.memory_space<vmem>>, vector<1x128x128xf32>
    %67 = vector.shape_cast %66 : vector<1x128x128xf32> to vector<128x128xf32>
    %cst_59 = arith.constant dense<0.000000e+00> : vector<33x128xf32>
    %68 = tpu.matmul %65, %67, %cst_59 {dimension_numbers = #tpu.dot_dimension_numbers<[1], [0], [0], [1], [0, 0, 1, 1], [], []>} : vector<33x128xf32>, vector<128x128xf32>, vector<33x128xf32> -> vector<33x128xf32>
    %69 = arith.addf %64, %68 : vector<33x128xf32>
    %c0_60 = arith.constant 0 : index
    %c0_61 = arith.constant 0 : index
    %70 = vector.load %arg5[%c0_60, %c0_61] : memref<1x128xf32, #tpu.memory_space<vmem>>, vector<1x128xf32>
    %71 = vector.broadcast %70 : vector<1x128xf32> to vector<33x128xf32>
    %72 = arith.addf %69, %71 : vector<33x128xf32>
    %73 = vector.extract_strided_slice %72 {offsets = [0, 0], sizes = [16, 128], strides = [1, 1]} : vector<33x128xf32> to vector<16x128xf32>
    %c0_62 = arith.constant 0 : index
    %c0_63 = arith.constant 0 : index
    %c0_64 = arith.constant 0 : index
    %74 = vector.load %arg6[%c0_62, %c0_63, %c0_64] : memref<2x16x128xf32, #tpu.memory_space<vmem>>, vector<1x16x128xf32>
    %75 = vector.shape_cast %74 : vector<1x16x128xf32> to vector<16x128xf32>
    %76 = vector.shape_cast %73 : vector<16x128xf32> to vector<1x16x128xf32>
    tpu.vector_store %arg6[%c0_62, %c0_63, %c0_64], %76 {strides = array<i32>} : memref<2x16x128xf32, #tpu.memory_space<vmem>>, vector<1x16x128xf32>,
    %77 = vector.extract_strided_slice %72 {offsets = [17, 0], sizes = [16, 128], strides = [1, 1]} : vector<33x128xf32> to vector<16x128xf32>
    %c1_65 = arith.constant 1 : index
    %c0_66 = arith.constant 0 : index
    %c0_67 = arith.constant 0 : index
    %78 = vector.load %arg6[%c1_65, %c0_66, %c0_67] : memref<2x16x128xf32, #tpu.memory_space<vmem>>, vector<1x16x128xf32>
    %79 = vector.shape_cast %78 : vector<1x16x128xf32> to vector<16x128xf32>
    %80 = vector.shape_cast %77 : vector<16x128xf32> to vector<1x16x128xf32>
    tpu.vector_store %arg6[%c1_65, %c0_66, %c0_67], %80 {strides = array<i32>} : memref<2x16x128xf32, #tpu.memory_space<vmem>>, vector<1x16x128xf32>,
    return
  }
  func.func @transform_0(%arg0: i32) -> (i32, i32, i32) {
    %c0_i32 = arith.constant 0 : i32
    %c0_i32_0 = arith.constant 0 : i32
    %c0_i32_1 = arith.constant 0 : i32
    return %arg0, %c0_i32, %c0_i32_0 : i32, i32, i32
  }
  func.func @transform_1(%arg0: i32) -> (i32, i32, i32) {
    %c0_i32 = arith.constant 0 : i32
    %c0_i32_0 = arith.constant 0 : i32
    %c0_i32_1 = arith.constant 0 : i32
    %c0_i32_2 = arith.constant 0 : i32
    return %c0_i32, %c0_i32_0, %c0_i32_1 : i32, i32, i32
  }
  func.func @transform_2(%arg0: i32) -> (i32, i32) {
    %c0_i32 = arith.constant 0 : i32
    %c0_i32_0 = arith.constant 0 : i32
    %c0_i32_1 = arith.constant 0 : i32
    return %c0_i32, %c0_i32_0 : i32, i32
  }
  func.func @transform_3(%arg0: i32) -> (i32, i32, i32) {
    %c0_i32 = arith.constant 0 : i32
    %c0_i32_0 = arith.constant 0 : i32
    %c0_i32_1 = arith.constant 0 : i32
    %c0_i32_2 = arith.constant 0 : i32
    return %c0_i32, %c0_i32_0, %c0_i32_1 : i32, i32, i32
  }
  func.func @transform_4(%arg0: i32) -> (i32, i32) {
    %c0_i32 = arith.constant 0 : i32
    %c0_i32_0 = arith.constant 0 : i32
    %c0_i32_1 = arith.constant 0 : i32
    return %c0_i32, %c0_i32_0 : i32, i32
  }
  func.func @transform_5(%arg0: i32) -> (i32, i32, i32) {
    %c0_i32 = arith.constant 0 : i32
    %c0_i32_0 = arith.constant 0 : i32
    %c0_i32_1 = arith.constant 0 : i32
    return %arg0, %c0_i32, %c0_i32_0 : i32, i32, i32
  }
}

</mosaic_0001>

<llo_original>
// kernel: tpu_custom_call.1
$region0: #{tpu_custom_call.1}
  #allocation0 [shape = 'u32[]', space=smem, size = 0x4, offset = 0x4, fixed_abs, tag = 'smem constant byte address 0x4 - core index']
  #allocation1 [shape = 'u32[144,128]{1,0:T(1,128)}', space=vmem, size = 0x12000, scoped, tag = 'internal scratch']
  #allocation2 [shape = 'f32[35,64]{1,0:T(8,128)}', space=vmem, size = 0x5000, scoped, tag = 'scratch operand']
  #allocation3 [shape = 'f32[35,128]{1,0:T(8,128)}', space=vmem, size = 0x5000, scoped, tag = 'scratch operand']
  %s0 = inlined_call_operand.hbm [shape: f32[2,16,64], index: 0, kind: input, shape index: {}]
  %s1 = inlined_call_operand.hbm [shape: f32[3,64,128], index: 1, kind: input, shape index: {}]
  %s2 = inlined_call_operand.vmem [shape: f32[1,128], index: 2, kind: input, shape index: {}]
  %s3 = inlined_call_operand.hbm [shape: f32[3,128,128], index: 3, kind: input, shape index: {}]
  %s4 = inlined_call_operand.vmem [shape: f32[1,128], index: 4, kind: input, shape index: {}]
  %s5 = inlined_call_operand.hbm [shape: f32[2,16,128], index: 5, kind: output, shape index: {}]
  %s6 = sld [smem:[#allocation0]]
  $region42: #{tpu_custom_call.1} parent=0
    _
  %s8 = ssub.s32 1, %s6
  %s9 = scalar_select 0, %s8, %s6
  $region1: #{tpu_custom_call.1} parent=0
    #allocation4 [shape = 'u8[16384]{0}', space=vmem, size = 0x4000, scoped, tag = 'input window, operand 0, single buffered']
    #allocation5 [shape = 's32[1]{0}', space=sflag, size = 0x4, scoped, tag = 'scoped memory for tpu_custom_call.1']
    #allocation6 [shape = 's32[1]{0}', space=sflag, size = 0x4, scoped, tag = 'scoped memory for tpu_custom_call.1']
    #allocation7 [shape = 'u8[98304]{0}', space=vmem, size = 0x18000, scoped, tag = 'input window, operand 1, single buffered']
    #allocation8 [shape = 's32[1]{0}', space=sflag, size = 0x4, scoped, tag = 'scoped memory for tpu_custom_call.1']
    #allocation9 [shape = 'u8[196608]{0}', space=vmem, size = 0x30000, scoped, tag = 'input window, operand 3, single buffered']
    #allocation10 [shape = 'u8[16384]{0}', space=vmem, size = 0x4000, scoped, tag = 'output window, operand 0, single buffered']
    %10 = vsyncpa [#allocation5], 0
    %11 = vsyncpa [#allocation8], 0
    %12 = vsyncpa [#allocation6], 0
    // Predicated region
    $region2: #{tpu_custom_call.1} parent=1 // pred_check
      _
    $region3: #{tpu_custom_call.1} parent=1 // pred_check_branch
      %14 = sbr.rel (0) target = $region5
    $region4: #{tpu_custom_call.1} parent=1 // pred_region
      %s16 = ssub.s32 512, 512
      %17 = vsyncadd [#allocation5], %s16
      %s18 = sshll.u32 [#allocation4], 4
      %s19 = int_to_ptr.vmem [resolvable:$true] %s18
      %24 = dma.hbm_to_vmem [thread:$0]  %s0, 512, %s19, [#allocation5], 128, 128, 8
    $region5: #{tpu_custom_call.1} parent=1 // pred_fallthru
      _
    // Predicated region
    $region6: #{tpu_custom_call.1} parent=1 // pred_check
      _
    $region7: #{tpu_custom_call.1} parent=1 // pred_check_branch
      %26 = sbr.rel (0) target = $region9
    $region8: #{tpu_custom_call.1} parent=1 // pred_region
      %s28 = ssub.s32 3072, 3072
      %29 = vsyncadd [#allocation8], %s28
      %s30 = sshll.u32 [#allocation7], 4
      %s31 = int_to_ptr.vmem [resolvable:$true] %s30
      %36 = dma.hbm_to_vmem [thread:$0]  %s1, 3072, %s31, [#allocation8], 128, 128, 8
    $region9: #{tpu_custom_call.1} parent=1 // pred_fallthru
      _
    // Predicated region
    $region10: #{tpu_custom_call.1} parent=1 // pred_check
      _
    $region11: #{tpu_custom_call.1} parent=1 // pred_check_branch
      %38 = sbr.rel (0) target = $region13
    $region12: #{tpu_custom_call.1} parent=1 // pred_region
      _
    $region13: #{tpu_custom_call.1} parent=1 // pred_fallthru
      _
    // Predicated region
    $region14: #{tpu_custom_call.1} parent=1 // pred_check
      _
    $region15: #{tpu_custom_call.1} parent=1 // pred_check_branch
      %40 = sbr.rel (0) target = $region17
    $region16: #{tpu_custom_call.1} parent=1 // pred_region
      %s42 = ssub.s32 6144, 6144
      %43 = vsyncadd [#allocation8], %s42
      %s44 = sshll.u32 [#allocation9], 4
      %s45 = int_to_ptr.vmem [resolvable:$true] %s44
      %50 = dma.hbm_to_vmem [thread:$0]  %s3, 6144, %s45, [#allocation8], 128, 128, 8
    $region17: #{tpu_custom_call.1} parent=1 // pred_fallthru
      _
    // Predicated region
    $region18: #{tpu_custom_call.1} parent=1 // pred_check
      _
    $region19: #{tpu_custom_call.1} parent=1 // pred_check_branch
      %52 = sbr.rel (0) target = $region21
    $region20: #{tpu_custom_call.1} parent=1 // pred_region
      _
    $region21: #{tpu_custom_call.1} parent=1 // pred_fallthru
      _
    // Predicated region
    $region22: #{tpu_custom_call.1} parent=1 // pred_check
      _
    $region23: #{tpu_custom_call.1} parent=1 // pred_check_branch
      %54 = sbr.rel (0) target = $region25
    $region24: #{tpu_custom_call.1} parent=1 // pred_region
      %55 = dma.done [#allocation5], 512
    $region25: #{tpu_custom_call.1} parent=1 // pred_fallthru
      _
    // Predicated region
    $region26: #{tpu_custom_call.1} parent=1 // pred_check
      _
    $region27: #{tpu_custom_call.1} parent=1 // pred_check_branch
      %57 = sbr.rel (0) target = $region29
    $region28: #{tpu_custom_call.1} parent=1 // pred_region
      %58 = dma.done [#allocation8], 3072
    $region29: #{tpu_custom_call.1} parent=1 // pred_fallthru
      _
    // Predicated region
    $region30: #{tpu_custom_call.1} parent=1 // pred_check
      _
    $region31: #{tpu_custom_call.1} parent=1 // pred_check_branch
      %60 = sbr.rel (0) target = $region33
    $region32: #{tpu_custom_call.1} parent=1 // pred_region
      %61 = dma.done [#allocation8], 6144
    $region33: #{tpu_custom_call.1} parent=1 // pred_fallthru
      _
    %vm62 = vcmask 516096
    %63 = vst.msk [vmem:[#allocation2] sm:$0x1] %vm62, 0.0
    %64 = vst.msk [vmem:[#allocation2 + $0x11] sm:$0x1] %vm62, 0.0
    %65 = vst.msk [vmem:[#allocation2 + $0x22] sm:$0x1] %vm62, 0.0
    %66 = vst [vmem:[#allocation3] sm:$0x1] 0.0
    %67 = vst [vmem:[#allocation3 + $0x22] sm:$0x1] 0.0
    %v68 = vld [vmem:[#allocation4] sm:$0xff]
    %v69 = vld [vmem:[#allocation4 + $0x8] sm:$0xff]
    %vm70 = vcmask 523264
    %71 = vst.msk [vmem:[#allocation2 + $0x1] sm:$0xff] %vm70, %v68
    %72 = vst.msk [vmem:[#allocation2 + $0x9] sm:$0xff] %vm70, %v69
    %s73 = scalar_lea.vmem [#allocation4], 16
    %v74 = vld [vmem:[%s73] sm:$0xff]
    %v75 = vld [vmem:[%s73 + $0x8] sm:$0xff]
    %76 = vst.msk [vmem:[#allocation2 + $0x12] sm:$0xff] %vm70, %v74
    %77 = vst.msk [vmem:[#allocation2 + $0x1a] sm:$0xff] %vm70, %v75
    %v78 = vld [vmem:[#allocation2] sm:$0xff]
    %v79 = vld [vmem:[#allocation2 + $0x8] sm:$0xff]
    %v80 = vld [vmem:[#allocation2 + $0x10] sm:$0xff]
    %v81 = vld [vmem:[#allocation2 + $0x18] sm:$0xff]
    %v82 = vld [vmem:[#allocation2 + $0x20] sm:$0x1]
    %v83 = vld [vmem:[#allocation7] sm:$0xff]
    %v84 = vld [vmem:[#allocation7 + $0x8] sm:$0xff]
    %v85 = vld [vmem:[#allocation7 + $0x10] sm:$0xff]
    %v86 = vld [vmem:[#allocation7 + $0x18] sm:$0xff]
    %v87 = vld [vmem:[#allocation7 + $0x20] sm:$0xff]
    %v88 = vld [vmem:[#allocation7 + $0x28] sm:$0xff]
    %v89 = vld [vmem:[#allocation7 + $0x30] sm:$0xff]
    %v90 = vld [vmem:[#allocation7 + $0x38] sm:$0xff]
    %v91 = vld [vmem:[#allocation2 + $0x1] sm:$0xff]
    %v92 = vld [vmem:[#allocation2 + $0x9] sm:$0xff]
    %v93 = vld [vmem:[#allocation2 + $0x11] sm:$0xff]
    %v94 = vld [vmem:[#allocation2 + $0x19] sm:$0xff]
    %v95 = vld [vmem:[#allocation2 + $0x21] sm:$0x1]
    %s96 = scalar_lea.vmem [#allocation7], 64
    %v97 = vld [vmem:[%s96] sm:$0xff]
    %v98 = vld [vmem:[%s96 + $0x8] sm:$0xff]
    %v99 = vld [vmem:[%s96 + $0x10] sm:$0xff]
    %v100 = vld [vmem:[%s96 + $0x18] sm:$0xff]
    %v101 = vld [vmem:[%s96 + $0x20] sm:$0xff]
    %v102 = vld [vmem:[%s96 + $0x28] sm:$0xff]
    %v103 = vld [vmem:[%s96 + $0x30] sm:$0xff]
    %v104 = vld [vmem:[%s96 + $0x38] sm:$0xff]
    %v106 = vsel %vm70, %v91, 0
    %v109 = vsel %vm70, %v92, 0
    %v112 = vsel %vm70, %v93, 0
    %v115 = vsel %vm70, %v94, 0
    %v118 = vsel %vm70, %v95, 0
    %120 = vmatprep.subr.mxu0 0.0
    %121 = vmatpush1.msra.mxu0 %v97
    %122 = vmatprep.subr.mxu0 0.0
    %123 = vmatpush1.msra.mxu0 %v98
    %124 = vmatprep.subr.mxu0 0.0
    %125 = vmatpush1.msra.mxu0 %v99
    %126 = vmatprep.subr.mxu0 0.0
    %127 = vmatpush1.msra.mxu0 %v100
    %128 = vmatprep.subr.mxu0 0.0
    %129 = vmatpush1.msra.mxu0 %v101
    %130 = vmatprep.subr.mxu0 0.0
    %131 = vmatpush1.msra.mxu0 %v102
    %132 = vmatprep.subr.mxu0 0.0
    %133 = vmatpush1.msra.mxu0 %v103
    %134 = vmatprep.subr.mxu0 0.0
    %135 = vmatpush1.msra.mxu0 %v104
    %136 = vmatprep.subr.mxu0 0.0
    %137 = vmatpush1.msra.mxu0 0.0
    %138 = vmatprep.subr.mxu0 0.0
    %139 = vmatpush1.msra.mxu0 0.0
    %140 = vmatprep.subr.mxu0 0.0
    %141 = vmatpush1.msra.mxu0 0.0
    %142 = vmatprep.subr.mxu0 0.0
    %143 = vmatpush1.msra.mxu0 0.0
    %144 = vmatprep.subr.mxu0 0.0
    %145 = vmatpush1.msra.mxu0 0.0
    %146 = vmatprep.subr.mxu0 0.0
    %147 = vmatpush1.msra.mxu0 0.0
    %148 = vmatprep.subr.mxu0 0.0
    %149 = vmatpush1.msra.mxu0 0.0
    %150 = vmatprep.subr.mxu0 0.0
    %151 = vmatpush1.msra.mxu0 0.0
    %152 = vmatprep.subr.mxu0 0.0
    %153 = vmatpush1.msra.mxu0 0.0
    %154 = vmatprep.subr.mxu0 0.0
    %155 = vmatpush1.msra.mxu0 0.0
    %156 = vmatprep.subr.mxu0 0.0
    %157 = vmatpush1.msra.mxu0 0.0
    %158 = vmatprep.subr.mxu0 0.0
    %159 = vmatpush1.msra.mxu0 0.0
    %160 = vmatprep.subr.mxu0 0.0
    %161 = vmatpush1.msra.mxu0 0.0
    %162 = vmatprep.subr.mxu0 0.0
    %163 = vmatpush1.msra.mxu0 0.0
    %164 = vmatprep.subr.mxu0 0.0
    %165 = vmatpush1.msra.mxu0 0.0
    %166 = vmatprep.subr.mxu0 0.0
    %167 = vmatpush1.msra.mxu0 0.0
    %168 = vmatprep.subr.mxu0 0.0
    %169 = vmatpush1.msra.mxu0 0.0
    %170 = vmatprep.subr.mxu0 0.0
    %171 = vmatpush1.msra.mxu0 0.0
    %172 = vmatprep.subr.mxu0 0.0
    %173 = vmatpush1.msra.mxu0 0.0
    %174 = vmatprep.subr.mxu0 0.0
    %175 = vmatpush1.msra.mxu0 0.0
    %176 = vmatprep.subr.mxu0 0.0
    %177 = vmatpush1.msra.mxu0 0.0
    %178 = vmatprep.subr.mxu0 0.0
    %179 = vmatpush1.msra.mxu0 0.0
    %180 = vmatprep.subr.mxu0 0.0
    %181 = vmatpush1.msra.mxu0 0.0
    %182 = vmatprep.subr.mxu0 0.0
    %183 = vmatpush1.msra.mxu0 0.0
    %184 = vmatprep.mubr.f32.mxu0 0.0
    %185 = vmatmul.mubr.f32.gmra.mrb[0].mxu0 %v106
    %v186 = vpop.f32.mrb[0].mxu0
    %v187 = vadd.f32 0.0, %v186
    %v188 = vpop.f32.mrb[0].mxu0
    %189 = vmatprep.mubr.f32.mxu0 0.0
    %190 = vmatmul.mubr.f32.gmra.mrb[0].mxu0 %v109
    %v191 = vpop.f32.mrb[0].mxu0
    %v192 = vadd.f32 0.0, %v191
    %v193 = vpop.f32.mrb[0].mxu0
    %194 = vmatprep.mubr.f32.mxu0 0.0
    %195 = vmatmul.mubr.f32.gmra.mrb[0].mxu0 %v112
    %v196 = vpop.f32.mrb[0].mxu0
    %v197 = vadd.f32 0.0, %v196
    %v198 = vpop.f32.mrb[0].mxu0
    %199 = vmatprep.mubr.f32.mxu0 0.0
    %200 = vmatmul.mubr.f32.gmra.mrb[0].mxu0 %v115
    %v201 = vpop.f32.mrb[0].mxu0
    %v202 = vadd.f32 0.0, %v201
    %v203 = vpop.f32.mrb[0].mxu0
    %204 = vmatprep.mubr.f32.mxu0 0.0
    %205 = vmatmul.mubr.f32.gmra.mrb[0].mxu0 %v118
    %v206 = vpop.f32.mrb[0].mxu0
    %v207 = vadd.f32 0.0, %v206
    %v208 = vpop.f32.mrb[0].mxu0
    %209 = vdwg.mxu0
    %v211 = vsel %vm70, %v78, 0
    %v214 = vsel %vm70, %v79, 0
    %v217 = vsel %vm70, %v80, 0
    %v220 = vsel %vm70, %v81, 0
    %v223 = vsel %vm70, %v82, 0
    %225 = vmatprep.subr.mxu0 0.0
    %226 = vmatpush1.msra.mxu0 %v83
    %227 = vmatprep.subr.mxu0 0.0
    %228 = vmatpush1.msra.mxu0 %v84
    %229 = vmatprep.subr.mxu0 0.0
    %230 = vmatpush1.msra.mxu0 %v85
    %231 = vmatprep.subr.mxu0 0.0
    %232 = vmatpush1.msra.mxu0 %v86
    %233 = vmatprep.subr.mxu0 0.0
    %234 = vmatpush1.msra.mxu0 %v87
    %235 = vmatprep.subr.mxu0 0.0
    %236 = vmatpush1.msra.mxu0 %v88
    %237 = vmatprep.subr.mxu0 0.0
    %238 = vmatpush1.msra.mxu0 %v89
    %239 = vmatprep.subr.mxu0 0.0
    %240 = vmatpush1.msra.mxu0 %v90
    %241 = vmatprep.subr.mxu0 0.0
    %242 = vmatpush1.msra.mxu0 0.0
    %243 = vmatprep.subr.mxu0 0.0
    %244 = vmatpush1.msra.mxu0 0.0
    %245 = vmatprep.subr.mxu0 0.0
    %246 = vmatpush1.msra.mxu0 0.0
    %247 = vmatprep.subr.mxu0 0.0
    %248 = vmatpush1.msra.mxu0 0.0
    %249 = vmatprep.subr.mxu0 0.0
    %250 = vmatpush1.msra.mxu0 0.0
    %251 = vmatprep.subr.mxu0 0.0
    %252 = vmatpush1.msra.mxu0 0.0
    %253 = vmatprep.subr.mxu0 0.0
    %254 = vmatpush1.msra.mxu0 0.0
    %255 = vmatprep.subr.mxu0 0.0
    %256 = vmatpush1.msra.mxu0 0.0
    %257 = vmatprep.subr.mxu0 0.0
    %258 = vmatpush1.msra.mxu0 0.0
    %259 = vmatprep.subr.mxu0 0.0
    %260 = vmatpush1.msra.mxu0 0.0
    %261 = vmatprep.subr.mxu0 0.0
    %262 = vmatpush1.msra.mxu0 0.0
    %263 = vmatprep.subr.mxu0 0.0
    %264 = vmatpush1.msra.mxu0 0.0
    %265 = vmatprep.subr.mxu0 0.0
    %266 = vmatpush1.msra.mxu0 0.0
    %267 = vmatprep.subr.mxu0 0.0
    %268 = vmatpush1.msra.mxu0 0.0
    %269 = vmatprep.subr.mxu0 0.0
    %270 = vmatpush1.msra.mxu0 0.0
    %271 = vmatprep.subr.mxu0 0.0
    %272 = vmatpush1.msra.mxu0 0.0
    %273 = vmatprep.subr.mxu0 0.0
    %274 = vmatpush1.msra.mxu0 0.0
    %275 = vmatprep.subr.mxu0 0.0
    %276 = vmatpush1.msra.mxu0 0.0
    %277 = vmatprep.subr.mxu0 0.0
    %278 = vmatpush1.msra.mxu0 0.0
    %279 = vmatprep.subr.mxu0 0.0
    %280 = vmatpush1.msra.mxu0 0.0
    %281 = vmatprep.subr.mxu0 0.0
    %282 = vmatpush1.msra.mxu0 0.0
    %283 = vmatprep.subr.mxu0 0.0
    %284 = vmatpush1.msra.mxu0 0.0
    %285 = vmatprep.subr.mxu0 0.0
    %286 = vmatpush1.msra.mxu0 0.0
    %287 = vmatprep.subr.mxu0 0.0
    %288 = vmatpush1.msra.mxu0 0.0
    %289 = vmatprep.mubr.f32.mxu0 0.0
    %290 = vmatmul.mubr.f32.gmra.mrb[0].mxu0 %v211
    %v291 = vpop.f32.mrb[0].mxu0
    %v292 = vadd.f32 %v187, %v291
    %v293 = vpop.f32.mrb[0].mxu0
    %294 = vmatprep.mubr.f32.mxu0 0.0
    %295 = vmatmul.mubr.f32.gmra.mrb[0].mxu0 %v214
    %v296 = vpop.f32.mrb[0].mxu0
    %v297 = vadd.f32 %v192, %v296
    %v298 = vpop.f32.mrb[0].mxu0
    %299 = vmatprep.mubr.f32.mxu0 0.0
    %300 = vmatmul.mubr.f32.gmra.mrb[0].mxu0 %v217
    %v301 = vpop.f32.mrb[0].mxu0
    %v302 = vadd.f32 %v197, %v301
    %v303 = vpop.f32.mrb[0].mxu0
    %304 = vmatprep.mubr.f32.mxu0 0.0
    %305 = vmatmul.mubr.f32.gmra.mrb[0].mxu0 %v220
    %v306 = vpop.f32.mrb[0].mxu0
    %v307 = vadd.f32 %v202, %v306
    %v308 = vpop.f32.mrb[0].mxu0
    %309 = vmatprep.mubr.f32.mxu0 0.0
    %310 = vmatmul.mubr.f32.gmra.mrb[0].mxu0 %v223
    %v311 = vpop.f32.mrb[0].mxu0
    %v312 = vadd.f32 %v207, %v311
    %v313 = vpop.f32.mrb[0].mxu0
    %314 = vdwg.mxu0
    %v315 = vld [vmem:[#allocation2 + $0x2] sm:$0xff]
    %v316 = vld [vmem:[#allocation2 + $0xa] sm:$0xff]
    %v317 = vld [vmem:[#allocation2 + $0x12] sm:$0xff]
    %v318 = vld [vmem:[#allocation2 + $0x1a] sm:$0xff]
    %v319 = vld [vmem:[#allocation2 + $0x22] sm:$0x1]
    %s320 = scalar_lea.vmem [#allocation7], 128
    %v321 = vld [vmem:[%s320] sm:$0xff]
    %v322 = vld [vmem:[%s320 + $0x8] sm:$0xff]
    %v323 = vld [vmem:[%s320 + $0x10] sm:$0xff]
    %v324 = vld [vmem:[%s320 + $0x18] sm:$0xff]
    %v325 = vld [vmem:[%s320 + $0x20] sm:$0xff]
    %v326 = vld [vmem:[%s320 + $0x28] sm:$0xff]
    %v327 = vld [vmem:[%s320 + $0x30] sm:$0xff]
    %v328 = vld [vmem:[%s320 + $0x38] sm:$0xff]
    %v330 = vsel %vm70, %v315, 0
    %v333 = vsel %vm70, %v316, 0
    %v336 = vsel %vm70, %v317, 0
    %v339 = vsel %vm70, %v318, 0
    %v342 = vsel %vm70, %v319, 0
    %344 = vmatprep.subr.mxu0 0.0
    %345 = vmatpush1.msra.mxu0 %v321
    %346 = vmatprep.subr.mxu0 0.0
    %347 = vmatpush1.msra.mxu0 %v322
    %348 = vmatprep.subr.mxu0 0.0
    %349 = vmatpush1.msra.mxu0 %v323
    %350 = vmatprep.subr.mxu0 0.0
    %351 = vmatpush1.msra.mxu0 %v324
    %352 = vmatprep.subr.mxu0 0.0
    %353 = vmatpush1.msra.mxu0 %v325
    %354 = vmatprep.subr.mxu0 0.0
    %355 = vmatpush1.msra.mxu0 %v326
    %356 = vmatprep.subr.mxu0 0.0
    %357 = vmatpush1.msra.mxu0 %v327
    %358 = vmatprep.subr.mxu0 0.0
    %359 = vmatpush1.msra.mxu0 %v328
    %360 = vmatprep.subr.mxu0 0.0
    %361 = vmatpush1.msra.mxu0 0.0
    %362 = vmatprep.subr.mxu0 0.0
    %363 = vmatpush1.msra.mxu0 0.0
    %364 = vmatprep.subr.mxu0 0.0
    %365 = vmatpush1.msra.mxu0 0.0
    %366 = vmatprep.subr.mxu0 0.0
    %367 = vmatpush1.msra.mxu0 0.0
    %368 = vmatprep.subr.mxu0 0.0
    %369 = vmatpush1.msra.mxu0 0.0
    %370 = vmatprep.subr.mxu0 0.0
    %371 = vmatpush1.msra.mxu0 0.0
    %372 = vmatprep.subr.mxu0 0.0
    %373 = vmatpush1.msra.mxu0 0.0
    %374 = vmatprep.subr.mxu0 0.0
    %375 = vmatpush1.msra.mxu0 0.0
    %376 = vmatprep.subr.mxu0 0.0
    %377 = vmatpush1.msra.mxu0 0.0
    %378 = vmatprep.subr.mxu0 0.0
    %379 = vmatpush1.msra.mxu0 0.0
    %380 = vmatprep.subr.mxu0 0.0
    %381 = vmatpush1.msra.mxu0 0.0
    %382 = vmatprep.subr.mxu0 0.0
    %383 = vmatpush1.msra.mxu0 0.0
    %384 = vmatprep.subr.mxu0 0.0
    %385 = vmatpush1.msra.mxu0 0.0
    %386 = vmatprep.subr.mxu0 0.0
    %387 = vmatpush1.msra.mxu0 0.0
    %388 = vmatprep.subr.mxu0 0.0
    %389 = vmatpush1.msra.mxu0 0.0
    %390 = vmatprep.subr.mxu0 0.0
    %391 = vmatpush1.msra.mxu0 0.0
    %392 = vmatprep.subr.mxu0 0.0
    %393 = vmatpush1.msra.mxu0 0.0
    %394 = vmatprep.subr.mxu0 0.0
    %395 = vmatpush1.msra.mxu0 0.0
    %396 = vmatprep.subr.mxu0 0.0
    %397 = vmatpush1.msra.mxu0 0.0
    %398 = vmatprep.subr.mxu0 0.0
    %399 = vmatpush1.msra.mxu0 0.0
    %400 = vmatprep.subr.mxu0 0.0
    %401 = vmatpush1.msra.mxu0 0.0
    %402 = vmatprep.subr.mxu0 0.0
    %403 = vmatpush1.msra.mxu0 0.0
    %404 = vmatprep.subr.mxu0 0.0
    %405 = vmatpush1.msra.mxu0 0.0
    %406 = vmatprep.subr.mxu0 0.0
    %407 = vmatpush1.msra.mxu0 0.0
    %408 = vmatprep.mubr.f32.mxu0 0.0
    %409 = vmatmul.mubr.f32.gmra.mrb[0].mxu0 %v330
    %v410 = vpop.f32.mrb[0].mxu0
    %v411 = vadd.f32 0.0, %v410
    %v412 = vpop.f32.mrb[0].mxu0
    %413 = vmatprep.mubr.f32.mxu0 0.0
    %414 = vmatmul.mubr.f32.gmra.mrb[0].mxu0 %v333
    %v415 = vpop.f32.mrb[0].mxu0
    %v416 = vadd.f32 0.0, %v415
    %v417 = vpop.f32.mrb[0].mxu0
    %418 = vmatprep.mubr.f32.mxu0 0.0
    %419 = vmatmul.mubr.f32.gmra.mrb[0].mxu0 %v336
    %v420 = vpop.f32.mrb[0].mxu0
    %v421 = vadd.f32 0.0, %v420
    %v422 = vpop.f32.mrb[0].mxu0
    %423 = vmatprep.mubr.f32.mxu0 0.0
    %424 = vmatmul.mubr.f32.gmra.mrb[0].mxu0 %v339
    %v425 = vpop.f32.mrb[0].mxu0
    %v426 = vadd.f32 0.0, %v425
    %v427 = vpop.f32.mrb[0].mxu0
    %428 = vmatprep.mubr.f32.mxu0 0.0
    %429 = vmatmul.mubr.f32.gmra.mrb[0].mxu0 %v342
    %v430 = vpop.f32.mrb[0].mxu0
    %v431 = vadd.f32 0.0, %v430
    %v432 = vpop.f32.mrb[0].mxu0
    %433 = vdwg.mxu0
    %v434 = vadd.f32 %v292, %v411
    %v435 = vadd.f32 %v297, %v416
    %v436 = vadd.f32 %v302, %v421
    %v437 = vadd.f32 %v307, %v426
    %v438 = vadd.f32 %v312, %v431
    %v439 = vld [vmem:[%s2] sm:$0x1]
    %v441 = vlaneseq
    %v442 = vshrl.u32 %v441, 7
    %v443 = vsub.s32 0, %v442
    %v444 = vrot.slane %v439, %v443
    %v446 = vadd.f32 %v434, %v444
    %v447 = vadd.f32 %v435, %v444
    %v448 = vadd.f32 %v436, %v444
    %v449 = vadd.f32 %v437, %v444
    %v450 = vadd.f32 %v438, %v444
    %v451 = vmax.f32 %v446, 0.0
    %v452 = vmax.f32 %v447, 0.0
    %v453 = vmax.f32 %v448, 0.0
    %v454 = vmax.f32 %v449, 0.0
    %v455 = vmax.f32 %v450, 0.0
    %v456 = vlaneseq
    %v457 = vshrl.u32 %v456, 7
    %v458 = vadd.s32 %v457, 8
    %v459 = vadd.s32 %v457, 16
    %v460 = vadd.s32 %v457, 24
    %v461 = vadd.s32 %v457, 32
    %vm462 = vcmp.lt.s32.totalorder %v457, 0
    %v463 = vsub.s32 0, %v457
    %v464 = vsel %vm462, %v463, %v457
    %v465 = vmul.u32.u64.compose %v464, 4042322161
    %v466 = vextract.low.u32 %v465
    %v467 = vextract.high.u32 %v465
    %v468 = vshrl.u32 %v467, 4
    %v469 = vmul.u32 %v468, 17
    %v470 = vsub.s32 %v464, %v469
    %v471 = vsub.s32 0, %v470
    %v472 = vsel %vm462, %v471, %v470
    %vm473 = vcmp.lt.s32.totalorder %v458, 0
    %v474 = vsub.s32 0, %v458
    %v475 = vsel %vm473, %v474, %v458
    %v476 = vmul.u32.u64.compose %v475, 4042322161
    %v477 = vextract.low.u32 %v476
    %v478 = vextract.high.u32 %v476
    %v479 = vshrl.u32 %v478, 4
    %v480 = vmul.u32 %v479, 17
    %v481 = vsub.s32 %v475, %v480
    %v482 = vsub.s32 0, %v481
    %v483 = vsel %vm473, %v482, %v481
    %vm484 = vcmp.lt.s32.totalorder %v459, 0
    %v485 = vsub.s32 0, %v459
    %v486 = vsel %vm484, %v485, %v459
    %v487 = vmul.u32.u64.compose %v486, 4042322161
    %v488 = vextract.low.u32 %v487
    %v489 = vextract.high.u32 %v487
    %v490 = vshrl.u32 %v489, 4
    %v491 = vmul.u32 %v490, 17
    %v492 = vsub.s32 %v486, %v491
    %v493 = vsub.s32 0, %v492
    %v494 = vsel %vm484, %v493, %v492
    %vm495 = vcmp.lt.s32.totalorder %v460, 0
    %v496 = vsub.s32 0, %v460
    %v497 = vsel %vm495, %v496, %v460
    %v498 = vmul.u32.u64.compose %v497, 4042322161
    %v499 = vextract.low.u32 %v498
    %v500 = vextract.high.u32 %v498
    %v501 = vshrl.u32 %v500, 4
    %v502 = vmul.u32 %v501, 17
    %v503 = vsub.s32 %v497, %v502
    %v504 = vsub.s32 0, %v503
    %v505 = vsel %vm495, %v504, %v503
    %vm506 = vcmp.lt.s32.totalorder %v461, 0
    %v507 = vsub.s32 0, %v461
    %v508 = vsel %vm506, %v507, %v461
    %v509 = vmul.u32.u64.compose %v508, 4042322161
    %v510 = vextract.low.u32 %v509
    %v511 = vextract.high.u32 %v509
    %v512 = vshrl.u32 %v511, 4
    %v513 = vmul.u32 %v512, 17
    %v514 = vsub.s32 %v508, %v513
    %v515 = vsub.s32 0, %v514
    %v516 = vsel %vm506, %v515, %v514
    %vm517 = vcmp.ne.s32.totalorder %v472, 0
    %vm518 = vcmp.ne.s32.totalorder %v483, 0
    %vm519 = vcmp.ne.s32.totalorder %v494, 0
    %vm520 = vcmp.ne.s32.totalorder %v505, 0
    %vm521 = vcmp.ne.s32.totalorder %v516, 0
    %vm522 = vcmp.lt.s32.totalorder %v472, 0
    %vm523 = vcmp.lt.s32.totalorder %v483, 0
    %vm524 = vcmp.lt.s32.totalorder %v494, 0
    %vm525 = vcmp.lt.s32.totalorder %v505, 0
    %vm526 = vcmp.lt.s32.totalorder %v516, 0
    %vm527 = vmand %vm522, %vm517
    %vm528 = vmand %vm523, %vm518
    %vm529 = vmand %vm524, %vm519
    %vm530 = vmand %vm525, %vm520
    %vm531 = vmand %vm526, %vm521
    %v532 = vadd.s32 %v472, 17
    %v533 = vadd.s32 %v483, 17
    %v534 = vadd.s32 %v494, 17
    %v535 = vadd.s32 %v505, 17
    %v536 = vadd.s32 %v516, 17
    %v537 = vsel %vm527, %v532, %v472
    %v538 = vsel %vm528, %v533, %v483
    %v539 = vsel %vm529, %v534, %v494
    %v540 = vsel %vm530, %v535, %v505
    %v541 = vsel %vm531, %v536, %v516
    %vm542 = vcmp.lt.s32.totalorder %v537, 16
    %vm543 = vcmp.lt.s32.totalorder %v538, 16
    %vm544 = vcmp.lt.s32.totalorder %v539, 16
    %vm545 = vcmp.lt.s32.totalorder %v540, 16
    %vm546 = vcmp.lt.s32.totalorder %v541, 16
    %v547 = vsel %vm542, 1, 0
    %v548 = vsel %vm543, 1, 0
    %v549 = vsel %vm544, 1, 0
    %v550 = vsel %vm545, 1, 0
    %v551 = vsel %vm546, 1, 0
    %vm552 = vcmp.eq.s32.totalorder %v547, 1
    %vm553 = vcmp.eq.s32.totalorder %v548, 1
    %vm554 = vcmp.eq.s32.totalorder %v549, 1
    %vm555 = vcmp.eq.s32.totalorder %v550, 1
    %vm556 = vcmp.eq.s32.totalorder %v551, 1
    %v557 = vsel %vm552, %v451, 0.0
    %v558 = vsel %vm553, %v452, 0.0
    %v559 = vsel %vm554, %v453, 0.0
    %v560 = vsel %vm555, %v454, 0.0
    %v561 = vsel %vm556, %v455, 0.0
    %562 = vst [vmem:[#allocation3 + $0x1] sm:$0xff] %v557
    %563 = vst [vmem:[#allocation3 + $0x9] sm:$0xff] %v558
    %564 = vst [vmem:[#allocation3 + $0x11] sm:$0xff] %v559
    %565 = vst [vmem:[#allocation3 + $0x19] sm:$0xff] %v560
    %566 = vst [vmem:[#allocation3 + $0x21] sm:$0x1] %v561
    %v567 = vld [vmem:[#allocation3] sm:$0xff]
    %v568 = vld [vmem:[#allocation3 + $0x8] sm:$0xff]
    %v569 = vld [vmem:[#allocation3 + $0x10] sm:$0xff]
    %v570 = vld [vmem:[#allocation3 + $0x18] sm:$0xff]
    %v571 = vld [vmem:[#allocation3 + $0x20] sm:$0x1]
    %v572 = vld [vmem:[#allocation9] sm:$0xff]
    %v573 = vld [vmem:[#allocation9 + $0x8] sm:$0xff]
    %v574 = vld [vmem:[#allocation9 + $0x10] sm:$0xff]
    %v575 = vld [vmem:[#allocation9 + $0x18] sm:$0xff]
    %v576 = vld [vmem:[#allocation9 + $0x20] sm:$0xff]
    %v577 = vld [vmem:[#allocation9 + $0x28] sm:$0xff]
    %v578 = vld [vmem:[#allocation9 + $0x30] sm:$0xff]
    %v579 = vld [vmem:[#allocation9 + $0x38] sm:$0xff]
    %v580 = vld [vmem:[#allocation9 + $0x40] sm:$0xff]
    %v581 = vld [vmem:[#allocation9 + $0x48] sm:$0xff]
    %v582 = vld [vmem:[#allocation9 + $0x50] sm:$0xff]
    %v583 = vld [vmem:[#allocation9 + $0x58] sm:$0xff]
    %v584 = vld [vmem:[#allocation9 + $0x60] sm:$0xff]
    %v585 = vld [vmem:[#allocation9 + $0x68] sm:$0xff]
    %v586 = vld [vmem:[#allocation9 + $0x70] sm:$0xff]
    %v587 = vld [vmem:[#allocation9 + $0x78] sm:$0xff]
    %v588 = vld [vmem:[#allocation3 + $0x1] sm:$0xff]
    %v589 = vld [vmem:[#allocation3 + $0x9] sm:$0xff]
    %v590 = vld [vmem:[#allocation3 + $0x11] sm:$0xff]
    %v591 = vld [vmem:[#allocation3 + $0x19] sm:$0xff]
    %v592 = vld [vmem:[#allocation3 + $0x21] sm:$0x1]
    %s593 = scalar_lea.vmem [#allocation9], 128
    %v594 = vld [vmem:[%s593] sm:$0xff]
    %v595 = vld [vmem:[%s593 + $0x8] sm:$0xff]
    %v596 = vld [vmem:[%s593 + $0x10] sm:$0xff]
    %v597 = vld [vmem:[%s593 + $0x18] sm:$0xff]
    %v598 = vld [vmem:[%s593 + $0x20] sm:$0xff]
    %v599 = vld [vmem:[%s593 + $0x28] sm:$0xff]
    %v600 = vld [vmem:[%s593 + $0x30] sm:$0xff]
    %v601 = vld [vmem:[%s593 + $0x38] sm:$0xff]
    %v602 = vld [vmem:[%s593 + $0x40] sm:$0xff]
    %v603 = vld [vmem:[%s593 + $0x48] sm:$0xff]
    %v604 = vld [vmem:[%s593 + $0x50] sm:$0xff]
    %v605 = vld [vmem:[%s593 + $0x58] sm:$0xff]
    %v606 = vld [vmem:[%s593 + $0x60] sm:$0xff]
    %v607 = vld [vmem:[%s593 + $0x68] sm:$0xff]
    %v608 = vld [vmem:[%s593 + $0x70] sm:$0xff]
    %v609 = vld [vmem:[%s593 + $0x78] sm:$0xff]
    %610 = vmatprep.subr.mxu0 0.0
    %611 = vmatpush1.msra.mxu0 %v594
    %612 = vmatprep.subr.mxu0 0.0
    %613 = vmatpush1.msra.mxu0 %v595
    %614 = vmatprep.subr.mxu0 0.0
    %615 = vmatpush1.msra.mxu0 %v596
    %616 = vmatprep.subr.mxu0 0.0
    %617 = vmatpush1.msra.mxu0 %v597
    %618 = vmatprep.subr.mxu0 0.0
    %619 = vmatpush1.msra.mxu0 %v598
    %620 = vmatprep.subr.mxu0 0.0
    %621 = vmatpush1.msra.mxu0 %v599
    %622 = vmatprep.subr.mxu0 0.0
    %623 = vmatpush1.msra.mxu0 %v600
    %624 = vmatprep.subr.mxu0 0.0
    %625 = vmatpush1.msra.mxu0 %v601
    %626 = vmatprep.subr.mxu0 0.0
    %627 = vmatpush1.msra.mxu0 %v602
    %628 = vmatprep.subr.mxu0 0.0
    %629 = vmatpush1.msra.mxu0 %v603
    %630 = vmatprep.subr.mxu0 0.0
    %631 = vmatpush1.msra.mxu0 %v604
    %632 = vmatprep.subr.mxu0 0.0
    %633 = vmatpush1.msra.mxu0 %v605
    %634 = vmatprep.subr.mxu0 0.0
    %635 = vmatpush1.msra.mxu0 %v606
    %636 = vmatprep.subr.mxu0 0.0
    %637 = vmatpush1.msra.mxu0 %v607
    %638 = vmatprep.subr.mxu0 0.0
    %639 = vmatpush1.msra.mxu0 %v608
    %640 = vmatprep.subr.mxu0 0.0
    %641 = vmatpush1.msra.mxu0 %v609
    %642 = vmatprep.subr.mxu0 0.0
    %643 = vmatpush1.msra.mxu0 0.0
    %644 = vmatprep.subr.mxu0 0.0
    %645 = vmatpush1.msra.mxu0 0.0
    %646 = vmatprep.subr.mxu0 0.0
    %647 = vmatpush1.msra.mxu0 0.0
    %648 = vmatprep.subr.mxu0 0.0
    %649 = vmatpush1.msra.mxu0 0.0
    %650 = vmatprep.subr.mxu0 0.0
    %651 = vmatpush1.msra.mxu0 0.0
    %652 = vmatprep.subr.mxu0 0.0
    %653 = vmatpush1.msra.mxu0 0.0
    %654 = vmatprep.subr.mxu0 0.0
    %655 = vmatpush1.msra.mxu0 0.0
    %656 = vmatprep.subr.mxu0 0.0
    %657 = vmatpush1.msra.mxu0 0.0
    %658 = vmatprep.subr.mxu0 0.0
    %659 = vmatpush1.msra.mxu0 0.0
    %660 = vmatprep.subr.mxu0 0.0
    %661 = vmatpush1.msra.mxu0 0.0
    %662 = vmatprep.subr.mxu0 0.0
    %663 = vmatpush1.msra.mxu0 0.0
    %664 = vmatprep.subr.mxu0 0.0
    %665 = vmatpush1.msra.mxu0 0.0
    %666 = vmatprep.subr.mxu0 0.0
    %667 = vmatpush1.msra.mxu0 0.0
    %668 = vmatprep.subr.mxu0 0.0
    %669 = vmatpush1.msra.mxu0 0.0
    %670 = vmatprep.subr.mxu0 0.0
    %671 = vmatpush1.msra.mxu0 0.0
    %672 = vmatprep.subr.mxu0 0.0
    %673 = vmatpush1.msra.mxu0 0.0
    %674 = vmatprep.mubr.f32.mxu0 0.0
    %675 = vmatmul.mubr.f32.gmra.mrb[0].mxu0 %v588
    %v676 = vpop.f32.mrb[0].mxu0
    %v677 = vadd.f32 0.0, %v676
    %v678 = vpop.f32.mrb[0].mxu0
    %679 = vmatprep.mubr.f32.mxu0 0.0
    %680 = vmatmul.mubr.f32.gmra.mrb[0].mxu0 %v589
    %v681 = vpop.f32.mrb[0].mxu0
    %v682 = vadd.f32 0.0, %v681
    %v683 = vpop.f32.mrb[0].mxu0
    %684 = vmatprep.mubr.f32.mxu0 0.0
    %685 = vmatmul.mubr.f32.gmra.mrb[0].mxu0 %v590
    %v686 = vpop.f32.mrb[0].mxu0
    %v687 = vadd.f32 0.0, %v686
    %v688 = vpop.f32.mrb[0].mxu0
    %689 = vmatprep.mubr.f32.mxu0 0.0
    %690 = vmatmul.mubr.f32.gmra.mrb[0].mxu0 %v591
    %v691 = vpop.f32.mrb[0].mxu0
    %v692 = vadd.f32 0.0, %v691
    %v693 = vpop.f32.mrb[0].mxu0
    %694 = vmatprep.mubr.f32.mxu0 0.0
    %695 = vmatmul.mubr.f32.gmra.mrb[0].mxu0 %v592
    %v696 = vpop.f32.mrb[0].mxu0
    %v697 = vadd.f32 0.0, %v696
    %v698 = vpop.f32.mrb[0].mxu0
    %699 = vdwg.mxu0
    %700 = vmatprep.subr.mxu0 0.0
    %701 = vmatpush1.msra.mxu0 %v572
    %702 = vmatprep.subr.mxu0 0.0
    %703 = vmatpush1.msra.mxu0 %v573
    %704 = vmatprep.subr.mxu0 0.0
    %705 = vmatpush1.msra.mxu0 %v574
    %706 = vmatprep.subr.mxu0 0.0
    %707 = vmatpush1.msra.mxu0 %v575
    %708 = vmatprep.subr.mxu0 0.0
    %709 = vmatpush1.msra.mxu0 %v576
    %710 = vmatprep.subr.mxu0 0.0
    %711 = vmatpush1.msra.mxu0 %v577
    %712 = vmatprep.subr.mxu0 0.0
    %713 = vmatpush1.msra.mxu0 %v578
    %714 = vmatprep.subr.mxu0 0.0
    %715 = vmatpush1.msra.mxu0 %v579
    %716 = vmatprep.subr.mxu0 0.0
    %717 = vmatpush1.msra.mxu0 %v580
    %718 = vmatprep.subr.mxu0 0.0
    %719 = vmatpush1.msra.mxu0 %v581
    %720 = vmatprep.subr.mxu0 0.0
    %721 = vmatpush1.msra.mxu0 %v582
    %722 = vmatprep.subr.mxu0 0.0
    %723 = vmatpush1.msra.mxu0 %v583
    %724 = vmatprep.subr.mxu0 0.0
    %725 = vmatpush1.msra.mxu0 %v584
    %726 = vmatprep.subr.mxu0 0.0
    %727 = vmatpush1.msra.mxu0 %v585
    %728 = vmatprep.subr.mxu0 0.0
    %729 = vmatpush1.msra.mxu0 %v586
    %730 = vmatprep.subr.mxu0 0.0
    %731 = vmatpush1.msra.mxu0 %v587
    %732 = vmatprep.subr.mxu0 0.0
    %733 = vmatpush1.msra.mxu0 0.0
    %734 = vmatprep.subr.mxu0 0.0
    %735 = vmatpush1.msra.mxu0 0.0
    %736 = vmatprep.subr.mxu0 0.0
    %737 = vmatpush1.msra.mxu0 0.0
    %738 = vmatprep.subr.mxu0 0.0
    %739 = vmatpush1.msra.mxu0 0.0
    %740 = vmatprep.subr.mxu0 0.0
    %741 = vmatpush1.msra.mxu0 0.0
    %742 = vmatprep.subr.mxu0 0.0
    %743 = vmatpush1.msra.mxu0 0.0
    %744 = vmatprep.subr.mxu0 0.0
    %745 = vmatpush1.msra.mxu0 0.0
    %746 = vmatprep.subr.mxu0 0.0
    %747 = vmatpush1.msra.mxu0 0.0
    %748 = vmatprep.subr.mxu0 0.0
    %749 = vmatpush1.msra.mxu0 0.0
    %750 = vmatprep.subr.mxu0 0.0
    %751 = vmatpush1.msra.mxu0 0.0
    %752 = vmatprep.subr.mxu0 0.0
    %753 = vmatpush1.msra.mxu0 0.0
    %754 = vmatprep.subr.mxu0 0.0
    %755 = vmatpush1.msra.mxu0 0.0
    %756 = vmatprep.subr.mxu0 0.0
    %757 = vmatpush1.msra.mxu0 0.0
    %758 = vmatprep.subr.mxu0 0.0
    %759 = vmatpush1.msra.mxu0 0.0
    %760 = vmatprep.subr.mxu0 0.0
    %761 = vmatpush1.msra.mxu0 0.0
    %762 = vmatprep.subr.mxu0 0.0
    %763 = vmatpush1.msra.mxu0 0.0
    %764 = vmatprep.mubr.f32.mxu0 0.0
    %765 = vmatmul.mubr.f32.gmra.mrb[0].mxu0 %v567
    %v766 = vpop.f32.mrb[0].mxu0
    %v767 = vadd.f32 %v677, %v766
    %v768 = vpop.f32.mrb[0].mxu0
    %769 = vmatprep.mubr.f32.mxu0 0.0
    %770 = vmatmul.mubr.f32.gmra.mrb[0].mxu0 %v568
    %v771 = vpop.f32.mrb[0].mxu0
    %v772 = vadd.f32 %v682, %v771
    %v773 = vpop.f32.mrb[0].mxu0
    %774 = vmatprep.mubr.f32.mxu0 0.0
    %775 = vmatmul.mubr.f32.gmra.mrb[0].mxu0 %v569
    %v776 = vpop.f32.mrb[0].mxu0
    %v777 = vadd.f32 %v687, %v776
    %v778 = vpop.f32.mrb[0].mxu0
    %779 = vmatprep.mubr.f32.mxu0 0.0
    %780 = vmatmul.mubr.f32.gmra.mrb[0].mxu0 %v570
    %v781 = vpop.f32.mrb[0].mxu0
    %v782 = vadd.f32 %v692, %v781
    %v783 = vpop.f32.mrb[0].mxu0
    %784 = vmatprep.mubr.f32.mxu0 0.0
    %785 = vmatmul.mubr.f32.gmra.mrb[0].mxu0 %v571
    %v786 = vpop.f32.mrb[0].mxu0
    %v787 = vadd.f32 %v697, %v786
    %v788 = vpop.f32.mrb[0].mxu0
    %789 = vdwg.mxu0
    %v790 = vld [vmem:[#allocation3 + $0x2] sm:$0xff]
    %v791 = vld [vmem:[#allocation3 + $0xa] sm:$0xff]
    %v792 = vld [vmem:[#allocation3 + $0x12] sm:$0xff]
    %v793 = vld [vmem:[#allocation3 + $0x1a] sm:$0xff]
    %v794 = vld [vmem:[#allocation3 + $0x22] sm:$0x1]
    %s795 = scalar_lea.vmem [#allocation9], 256
    %v796 = vld [vmem:[%s795] sm:$0xff]
    %v797 = vld [vmem:[%s795 + $0x8] sm:$0xff]
    %v798 = vld [vmem:[%s795 + $0x10] sm:$0xff]
    %v799 = vld [vmem:[%s795 + $0x18] sm:$0xff]
    %v800 = vld [vmem:[%s795 + $0x20] sm:$0xff]
    %v801 = vld [vmem:[%s795 + $0x28] sm:$0xff]
    %v802 = vld [vmem:[%s795 + $0x30] sm:$0xff]
    %v803 = vld [vmem:[%s795 + $0x38] sm:$0xff]
    %v804 = vld [vmem:[%s795 + $0x40] sm:$0xff]
    %v805 = vld [vmem:[%s795 + $0x48] sm:$0xff]
    %v806 = vld [vmem:[%s795 + $0x50] sm:$0xff]
    %v807 = vld [vmem:[%s795 + $0x58] sm:$0xff]
    %v808 = vld [vmem:[%s795 + $0x60] sm:$0xff]
    %v809 = vld [vmem:[%s795 + $0x68] sm:$0xff]
    %v810 = vld [vmem:[%s795 + $0x70] sm:$0xff]
    %v811 = vld [vmem:[%s795 + $0x78] sm:$0xff]
    %812 = vmatprep.subr.mxu0 0.0
    %813 = vmatpush1.msra.mxu0 %v796
    %814 = vmatprep.subr.mxu0 0.0
    %815 = vmatpush1.msra.mxu0 %v797
    %816 = vmatprep.subr.mxu0 0.0
    %817 = vmatpush1.msra.mxu0 %v798
    %818 = vmatprep.subr.mxu0 0.0
    %819 = vmatpush1.msra.mxu0 %v799
    %820 = vmatprep.subr.mxu0 0.0
    %821 = vmatpush1.msra.mxu0 %v800
    %822 = vmatprep.subr.mxu0 0.0
    %823 = vmatpush1.msra.mxu0 %v801
    %824 = vmatprep.subr.mxu0 0.0
    %825 = vmatpush1.msra.mxu0 %v802
    %826 = vmatprep.subr.mxu0 0.0
    %827 = vmatpush1.msra.mxu0 %v803
    %828 = vmatprep.subr.mxu0 0.0
    %829 = vmatpush1.msra.mxu0 %v804
    %830 = vmatprep.subr.mxu0 0.0
    %831 = vmatpush1.msra.mxu0 %v805
    %832 = vmatprep.subr.mxu0 0.0
    %833 = vmatpush1.msra.mxu0 %v806
    %834 = vmatprep.subr.mxu0 0.0
    %835 = vmatpush1.msra.mxu0 %v807
    %836 = vmatprep.subr.mxu0 0.0
    %837 = vmatpush1.msra.mxu0 %v808
    %838 = vmatprep.subr.mxu0 0.0
    %839 = vmatpush1.msra.mxu0 %v809
    %840 = vmatprep.subr.mxu0 0.0
    %841 = vmatpush1.msra.mxu0 %v810
    %842 = vmatprep.subr.mxu0 0.0
    %843 = vmatpush1.msra.mxu0 %v811
    %844 = vmatprep.subr.mxu0 0.0
    %845 = vmatpush1.msra.mxu0 0.0
    %846 = vmatprep.subr.mxu0 0.0
    %847 = vmatpush1.msra.mxu0 0.0
    %848 = vmatprep.subr.mxu0 0.0
    %849 = vmatpush1.msra.mxu0 0.0
    %850 = vmatprep.subr.mxu0 0.0
    %851 = vmatpush1.msra.mxu0 0.0
    %852 = vmatprep.subr.mxu0 0.0
    %853 = vmatpush1.msra.mxu0 0.0
    %854 = vmatprep.subr.mxu0 0.0
    %855 = vmatpush1.msra.mxu0 0.0
    %856 = vmatprep.subr.mxu0 0.0
    %857 = vmatpush1.msra.mxu0 0.0
    %858 = vmatprep.subr.mxu0 0.0
    %859 = vmatpush1.msra.mxu0 0.0
    %860 = vmatprep.subr.mxu0 0.0
    %861 = vmatpush1.msra.mxu0 0.0
    %862 = vmatprep.subr.mxu0 0.0
    %863 = vmatpush1.msra.mxu0 0.0
    %864 = vmatprep.subr.mxu0 0.0
    %865 = vmatpush1.msra.mxu0 0.0
    %866 = vmatprep.subr.mxu0 0.0
    %867 = vmatpush1.msra.mxu0 0.0
    %868 = vmatprep.subr.mxu0 0.0
    %869 = vmatpush1.msra.mxu0 0.0
    %870 = vmatprep.subr.mxu0 0.0
    %871 = vmatpush1.msra.mxu0 0.0
    %872 = vmatprep.subr.mxu0 0.0
    %873 = vmatpush1.msra.mxu0 0.0
    %874 = vmatprep.subr.mxu0 0.0
    %875 = vmatpush1.msra.mxu0 0.0
    %876 = vmatprep.mubr.f32.mxu0 0.0
    %877 = vmatmul.mubr.f32.gmra.mrb[0].mxu0 %v790
    %v878 = vpop.f32.mrb[0].mxu0
    %v879 = vadd.f32 0.0, %v878
    %v880 = vpop.f32.mrb[0].mxu0
    %881 = vmatprep.mubr.f32.mxu0 0.0
    %882 = vmatmul.mubr.f32.gmra.mrb[0].mxu0 %v791
    %v883 = vpop.f32.mrb[0].mxu0
    %v884 = vadd.f32 0.0, %v883
    %v885 = vpop.f32.mrb[0].mxu0
    %886 = vmatprep.mubr.f32.mxu0 0.0
    %887 = vmatmul.mubr.f32.gmra.mrb[0].mxu0 %v792
    %v888 = vpop.f32.mrb[0].mxu0
    %v889 = vadd.f32 0.0, %v888
    %v890 = vpop.f32.mrb[0].mxu0
    %891 = vmatprep.mubr.f32.mxu0 0.0
    %892 = vmatmul.mubr.f32.gmra.mrb[0].mxu0 %v793
    %v893 = vpop.f32.mrb[0].mxu0
    %v894 = vadd.f32 0.0, %v893
    %v895 = vpop.f32.mrb[0].mxu0
    %896 = vmatprep.mubr.f32.mxu0 0.0
    %897 = vmatmul.mubr.f32.gmra.mrb[0].mxu0 %v794
    %v898 = vpop.f32.mrb[0].mxu0
    %v899 = vadd.f32 0.0, %v898
    %v900 = vpop.f32.mrb[0].mxu0
    %901 = vdwg.mxu0
    %v902 = vadd.f32 %v767, %v879
    %v903 = vadd.f32 %v772, %v884
    %v904 = vadd.f32 %v777, %v889
    %v905 = vadd.f32 %v782, %v894
    %v906 = vadd.f32 %v787, %v899
    %v907 = vld [vmem:[%s4] sm:$0x1]
    %v909 = vlaneseq
    %v910 = vshrl.u32 %v909, 7
    %v911 = vsub.s32 0, %v910
    %v912 = vrot.slane %v907, %v911
    %v914 = vadd.f32 %v902, %v912
    %v915 = vadd.f32 %v903, %v912
    %v916 = vadd.f32 %v904, %v912
    %v917 = vadd.f32 %v905, %v912
    %v918 = vadd.f32 %v906, %v912
    %919 = vst [vmem:[#allocation10] sm:$0xff] %v914
    %920 = vst [vmem:[#allocation10 + $0x8] sm:$0xff] %v915
    %s921 = scalar_lea.vmem [#allocation10], 16
    %922 = vst [vmem:[%s921 - $0x1] sm:$0xfe] %v916
    %923 = vst [vmem:[%s921 + $0x7] sm:$0xff] %v917
    %924 = vst [vmem:[%s921 + $0xf] sm:$0x1] %v918
    // Predicated region
    $region34: #{tpu_custom_call.1} parent=1 // pred_check
      _
    $region35: #{tpu_custom_call.1} parent=1 // pred_check_branch
      %926 = sbr.rel (0) target = $region37
    $region36: #{tpu_custom_call.1} parent=1 // pred_region
      %s928 = ssub.s32 512, 512
      %929 = vsyncadd [#allocation6], %s928
      %s930 = sshll.u32 [#allocation10], 4
      %s931 = int_to_ptr.vmem [resolvable:$true] %s930
      %936 = dma.vmem_to_hbm [thread:$0]  %s931, 512, %s5, [#allocation6], 128, 128, 8
    $region37: #{tpu_custom_call.1} parent=1 // pred_fallthru
      _
    // Predicated region
    $region38: #{tpu_custom_call.1} parent=1 // pred_check
      _
    $region39: #{tpu_custom_call.1} parent=1 // pred_check_branch
      %938 = sbr.rel (0) target = $region41
    $region40: #{tpu_custom_call.1} parent=1 // pred_region
      %939 = dma.done [#allocation6], 512
    $region41: #{tpu_custom_call.1} parent=1 // pred_fallthru
      _
    %940 = vsyncpa [#allocation5], 1
    %941 = vsyncpa [#allocation8], 1
    %942 = vsyncpa [#allocation6], 1

</llo_original>
